<compile_context>
chip_gen: v7x
topology: tpu7x:2x2x1
jax: 0.10.0
libtpu: 0.0.40
codegen_flags: <defaults>
</compile_context>

<pallas_src>
import functools

import jax
import jax.numpy as jnp
from jax.experimental import pallas as pl
from jax.experimental.pallas import tpu as pltpu


# ----------------------------- Pallas kernel --------------------------------
def _dynamics_kernel(
    x_ref,      # (TM, hidden_dim)                 input rows (bf16 or f32)
    wx_ref,     # (hidden_dim, 2*hd + hidden//2)   packed [wh@M^s | wh@M^(s-1) | wl1]
    bl1_ref,    # (1, hidden//2)                   l_function[0] bias (f32)
    w2_ref,     # (hidden//2, 2*hd + motive_rank)  packed [0.1*wl2@S | 0.1*wl2@S1 | wl2]
    b2_ref,     # (1, 2*hd + motive_rank)          packed [bias_final | bias_prev | bl2]
    out_ref,    # (TM, 2*hd + motive_rank)         [hc | ff | lv]
    sums_ref,   # (8, 8)                           per-tile sum-of-squares (rows 0..2)
    *,
    height_dim: int,
    rows: int,
    tile: int,
):
    hd = height_dim

    # One MXU pass over x produces both height branches and the l_function hidden.
    xw = jnp.dot(x_ref[...], wx_ref[...], preferred_element_type=jnp.float32)

    h1 = xw[:, 2 * hd:] + bl1_ref[...]
    h1 = h1 * jax.nn.sigmoid(h1)                       # SiLU (f32)

    # Small second matmul folds the closed-form step operator and l_function[2].
    h2 = jnp.dot(h1, w2_ref[...], preferred_element_type=jnp.float32) + b2_ref[...]

    hc = xw[:, :hd] + h2[:, :hd]                       # height_coords after `steps`
    hp = xw[:, hd:2 * hd] + h2[:, hd:2 * hd]           # height_coords after steps-1
    ff = hc - hp                                       # last step's flow_field
    lv = h2[:, 2 * hd:]                                # l_function(x)

    # Single lane-concatenated store per tile (ragged tail rows masked by Pallas).
    out_ref[...] = jnp.concatenate([hc, ff, lv], axis=-1)

    # Fused norm partial sums; mask out ragged-tail garbage rows.
    ridx = jax.lax.broadcasted_iota(jnp.int32, (tile, 1), 0) + pl.program_id(0) * tile
    valid = ridx < rows

    def ssq(v):
        vm = jnp.where(valid, v, 0.0)
        return jnp.sum(vm * vm)

    ones = jnp.ones((1, 8), jnp.float32)
    sums_ref[...] = jnp.concatenate(
        [ssq(hc) * ones, ssq(ff) * ones, ssq(lv) * ones,
         jnp.zeros((5, 8), jnp.float32)],
        axis=0,
    )


# ------------------------------- wrapper -------------------------------------
def _round_up(n: int, m: int) -> int:
    return ((n + m - 1) // m) * m


def arithmetic_dynamics_forward(x, params, *, steps=1, row_tile=512, bf16_matmul=True):
    """x: (B, S, hidden_dim) float32. Returns (height_coords, metrics)."""
    assert steps >= 1, "forward() needs at least one dynamics step"
    B, S, H = x.shape
    hd = params["wh"].shape[1]
    mr = params["wl2"].shape[1]
    half = params["wl1"].shape[1]
    assert mr == hd, "forward() requires motive_rank == height_dim (torch .view)"

    rows = B * S
    # Big tiles (HBM roofline: 256->63%, 512->85%); only shrink to get >=8 grid
    # steps (pipelining / v7x dual-TC) and never below the ~256-row knee.
    tile = min(_round_up(row_tile, 8), _round_up(rows, 8))
    if pl.cdiv(rows, tile) < 8:
        tile = max(min(256, tile), _round_up(pl.cdiv(rows, 8), 8))
    grid = pl.cdiv(rows, tile)

    x2 = x.reshape(rows, H)                           # no padding, no trim

    # --- fold coupling + the `steps` loop into the weights (host side, tiny) ---
    # einsum('ph,bsh->bsh', coupling, f) == coupling.sum(0) * f
    csum = jnp.sum(params["coupling"], axis=0, keepdims=True)        # (1, hd)
    wfe = params["wf"] * csum                                         # (hd, hd)
    bfe = params["bf"] * csum                                         # (1, hd)
    eye = jnp.eye(hd, dtype=jnp.float32)
    M = eye + wfe
    Ps = [eye]
    for _ in range(steps):
        Ps.append(Ps[-1] @ M)
    Mp, Mp1 = Ps[steps], Ps[steps - 1]
    S_sum = sum(Ps[:steps])                                           # I+M+...+M^(s-1)
    S1_sum = sum(Ps[:steps - 1]) if steps >= 2 else jnp.zeros_like(eye)

    # hc_final = x@(wh@Mp) + silu(x@wl1+bl1)@(0.1*wl2@S) + bias_final, similarly prev.
    wx = jnp.concatenate([params["wh"] @ Mp, params["wh"] @ Mp1, params["wl1"]], axis=1)
    w2 = jnp.concatenate(
        [0.1 * (params["wl2"] @ S_sum), 0.1 * (params["wl2"] @ S1_sum), params["wl2"]],
        axis=1,
    )
    bias_f = params["bh"] @ Mp + bfe @ S_sum + 0.1 * (params["bl2"] @ S_sum)
    bias_p = params["bh"] @ Mp1 + bfe @ S1_sum + 0.1 * (params["bl2"] @ S1_sum)
    b2 = jnp.concatenate([bias_f, bias_p, params["bl2"]], axis=1)

    # bf16 for the dominant HBM stream (x) and its weights; accumulation stays f32.
    in_dtype = jnp.bfloat16 if bf16_matmul else x2.dtype
    x_in = x2.astype(in_dtype)
    wx_in = wx.astype(in_dtype)

    out_w = 2 * hd + mr
    full = lambda i: (0, 0)
    kernel = functools.partial(_dynamics_kernel, height_dim=hd, rows=rows, tile=tile)

    out, sums = pl.pallas_call(
        kernel,
        grid=(grid,),
        in_specs=[
            pl.BlockSpec((tile, H), lambda i: (i, 0)),     # x rows (ragged tail ok)
            pl.BlockSpec(wx.shape, full),                  # packed x-side weights
            pl.BlockSpec(params["bl1"].shape, full),
            pl.BlockSpec(w2.shape, full),
            pl.BlockSpec(b2.shape, full),
        ],
        out_specs=(
            pl.BlockSpec((tile, out_w), lambda i: (i, 0)),
            pl.BlockSpec((8, 8), lambda i: (i, 0)),
        ),
        out_shape=(
            jax.ShapeDtypeStruct((rows, out_w), jnp.float32),
            jax.ShapeDtypeStruct((grid * 8, 8), jnp.float32),
        ),
        compiler_params=pltpu.CompilerParams(dimension_semantics=("parallel",)),
    )(x_in, wx_in, params["bl1"], w2, b2)

    height_coords = out[:, :hd].reshape(B, S, hd)

    tot = sums.reshape(grid, 8, 8)[:, :3, 0].sum(axis=0)   # 3 partial sums per tile
    metrics = {
        "height_norm": jnp.sqrt(tot[0]),
        "flow_norm": jnp.sqrt(tot[1]),
        "l_values_norm": jnp.sqrt(tot[2]),
        "coupling_norm": jnp.linalg.norm(params["coupling"]),
    }
    # TODO(synk): return_trajectory=True (list of per-step clones) is host-side
    # bookkeeping, not implemented in the kernel.
    return height_coords, metrics


# ------------------------- deterministic parameters ---------------------------
def init_params(key, hidden_dim, motive_rank, num_primes, height_dim):
    ks = jax.random.split(key, 10)
    half = hidden_dim // 2

    def lin(k, fan_in, fan_out):
        kw, kb = jax.random.split(k)
        bound = 1.0 / jnp.sqrt(fan_in)
        w = jax.random.uniform(kw, (fan_in, fan_out), jnp.float32, -bound, bound)
        b = jax.random.uniform(kb, (1, fan_out), jnp.float32, -bound, bound)
        return w, b

    wh, bh = lin(ks[0], hidden_dim, height_dim)      # height_map
    wf, bf = lin(ks[1], height_dim, height_dim)      # flow
    wl1, bl1 = lin(ks[2], hidden_dim, half)          # l_function[0]
    wl2, bl2 = lin(ks[3], half, motive_rank)         # l_function[2]
    coupling = jax.random.normal(
        ks[4], (num_primes, height_dim), jnp.float32
    ) / jnp.sqrt(float(num_primes * height_dim))
    return {
        "wh": wh, "bh": bh,
        "wf": wf, "bf": bf,
        "wl1": wl1, "bl1": bl1,
        "wl2": wl2, "bl2": bl2,
        "coupling": coupling,
    }


# ------------------------- pure-JAX reference (validation) --------------------
def _reference_forward(x, params, steps):
    B, S, H = x.shape
    hd = params["wh"].shape[1]
    mr = params["wl2"].shape[1]
    x2 = x.reshape(-1, H)
    hc = x2 @ params["wh"] + params["bh"]
    lv = jax.nn.silu(x2 @ params["wl1"] + params["bl1"]) @ params["wl2"] + params["bl2"]
    csum = params["coupling"].sum(0, keepdims=True)
    ff = jnp.zeros_like(hc)
    for _ in range(steps):
        base = hc @ params["wf"] + params["bf"]
        ff = csum * base + 0.1 * lv
        hc = hc + ff
    return hc.reshape(B, S, hd), ff.reshape(B, S, hd), lv.reshape(B, S, mr)


if __name__ == "__main__":
    hidden_dim = 32
    motive_rank = 4   # must equal height_dim for forward()'s .view to be valid
    height_dim = 4
    num_primes = 8

    key = jax.random.PRNGKey(0)
    kx, kp, kv = jax.random.split(key, 3)
    params = init_params(kp, hidden_dim, motive_rank, num_primes, height_dim)

    # Correctness check: f32 path, ragged row count (14 rows), steps=2 exercises the
    # closed-form collapse of the dynamics loop.
    xv = jax.random.normal(kv, (2, 7, hidden_dim), jnp.float32)
    hc_k, m_k = arithmetic_dynamics_forward(xv, params, steps=2, bf16_matmul=False)
    hc_r, ff_r, lv_r = _reference_forward(xv, params, 2)
    assert bool(jnp.allclose(hc_k, hc_r, rtol=1e-3, atol=1e-4))
    assert bool(jnp.allclose(m_k["height_norm"], jnp.linalg.norm(hc_r), rtol=1e-3, atol=1e-4))
    assert bool(jnp.allclose(m_k["flow_norm"], jnp.linalg.norm(ff_r), rtol=1e-3, atol=1e-4))
    assert bool(jnp.allclose(m_k["l_values_norm"], jnp.linalg.norm(lv_r), rtol=1e-3, atol=1e-4))

    # Default run (bf16 x / packed weights on the MXU, f32 everywhere after).
    batch, seq = 2, 8
    x = jax.random.normal(kx, (batch, seq, hidden_dim), jnp.float32)
    height_coords, metrics = arithmetic_dynamics_forward(x, params, steps=1)
    jax.block_until_ready(height_coords)
    jax.block_until_ready(metrics["height_norm"])
    print("KERNEL_OK")
</pallas_src>

<mosaic_0001>
module attributes {stable_mosaic.version = 11 : i64} {
  func.func @_dynamics_kernel(%arg0: i32, %arg1: memref<16x32xf32, #tpu.memory_space<vmem>>, %arg2: memref<32x24xf32, #tpu.memory_space<vmem>>, %arg3: memref<1x16xf32, #tpu.memory_space<vmem>>, %arg4: memref<16x12xf32, #tpu.memory_space<vmem>>, %arg5: memref<1x12xf32, #tpu.memory_space<vmem>>, %arg6: memref<16x12xf32, #tpu.memory_space<vmem>>, %arg7: memref<8x8xf32, #tpu.memory_space<vmem>>) attributes {dimension_semantics = [#tpu.dimension_semantics<parallel>], iteration_bounds = array<i64: 1>, scalar_prefetch = 0 : i64, scratch_operands = 0 : i64, tpu.core_type = #tpu.core_type<tc>, window_params = [{transform_indices = @transform_0, window_bounds = array<i64: 16, 32>}, {pipeline_mode = #tpu.pipeline_mode<synchronous>, transform_indices = @transform_1, window_bounds = array<i64: 32, 24>}, {pipeline_mode = #tpu.pipeline_mode<synchronous>, transform_indices = @transform_2, window_bounds = array<i64: 1, 16>}, {pipeline_mode = #tpu.pipeline_mode<synchronous>, transform_indices = @transform_3, window_bounds = array<i64: 16, 12>}, {pipeline_mode = #tpu.pipeline_mode<synchronous>, transform_indices = @transform_4, window_bounds = array<i64: 1, 12>}, {transform_indices = @transform_5, window_bounds = array<i64: 16, 12>}, {transform_indices = @transform_6, window_bounds = array<i64: 8, 8>}]} {
    %c0 = arith.constant 0 : index
    %c0_0 = arith.constant 0 : index
    %0 = vector.load %arg1[%c0, %c0_0] : memref<16x32xf32, #tpu.memory_space<vmem>>, vector<16x32xf32>
    %c0_1 = arith.constant 0 : index
    %c0_2 = arith.constant 0 : index
    %1 = vector.load %arg2[%c0_1, %c0_2] : memref<32x24xf32, #tpu.memory_space<vmem>>, vector<32x24xf32>
    %cst = arith.constant dense<0.000000e+00> : vector<16x24xf32>
    %2 = tpu.matmul %0, %1, %cst {dimension_numbers = #tpu.dot_dimension_numbers<[1], [0], [0], [1], [0, 0, 1, 1], [], []>} : vector<16x32xf32>, vector<32x24xf32>, vector<16x24xf32> -> vector<16x24xf32>
    %3 = vector.extract_strided_slice %2 {offsets = [0, 8], sizes = [16, 16], strides = [1, 1]} : vector<16x24xf32> to vector<16x16xf32>
    %c0_3 = arith.constant 0 : index
    %c0_4 = arith.constant 0 : index
    %4 = vector.load %arg3[%c0_3, %c0_4] : memref<1x16xf32, #tpu.memory_space<vmem>>, vector<1x16xf32>
    %5 = vector.broadcast %4 : vector<1x16xf32> to vector<16x16xf32>
    %6 = arith.addf %3, %5 : vector<16x16xf32>
    %7 = arith.negf %6 : vector<16x16xf32>
    %8 = math.exp %7 : vector<16x16xf32>
    %cst_5 = arith.constant 1.000000e+00 : f32
    %9 = vector.broadcast %cst_5 : f32 to vector<16x16xf32>
    %10 = arith.addf %9, %8 : vector<16x16xf32>
    %11 = arith.divf %9, %10 : vector<16x16xf32>
    %12 = arith.mulf %6, %11 : vector<16x16xf32>
    %c0_6 = arith.constant 0 : index
    %c0_7 = arith.constant 0 : index
    %13 = vector.load %arg4[%c0_6, %c0_7] : memref<16x12xf32, #tpu.memory_space<vmem>>, vector<16x12xf32>
    %cst_8 = arith.constant dense<0.000000e+00> : vector<16x12xf32>
    %14 = tpu.matmul %12, %13, %cst_8 {dimension_numbers = #tpu.dot_dimension_numbers<[1], [0], [0], [1], [0, 0, 1, 1], [], []>} : vector<16x16xf32>, vector<16x12xf32>, vector<16x12xf32> -> vector<16x12xf32>
    %c0_9 = arith.constant 0 : index
    %c0_10 = arith.constant 0 : index
    %15 = vector.load %arg5[%c0_9, %c0_10] : memref<1x12xf32, #tpu.memory_space<vmem>>, vector<1x12xf32>
    %16 = vector.broadcast %15 : vector<1x12xf32> to vector<16x12xf32>
    %17 = arith.addf %14, %16 : vector<16x12xf32>
    %18 = vector.extract_strided_slice %2 {offsets = [0, 0], sizes = [16, 4], strides = [1, 1]} : vector<16x24xf32> to vector<16x4xf32>
    %19 = vector.extract_strided_slice %17 {offsets = [0, 0], sizes = [16, 4], strides = [1, 1]} : vector<16x12xf32> to vector<16x4xf32>
    %20 = arith.addf %18, %19 : vector<16x4xf32>
    %21 = vector.extract_strided_slice %2 {offsets = [0, 4], sizes = [16, 4], strides = [1, 1]} : vector<16x24xf32> to vector<16x4xf32>
    %22 = vector.extract_strided_slice %17 {offsets = [0, 4], sizes = [16, 4], strides = [1, 1]} : vector<16x12xf32> to vector<16x4xf32>
    %23 = arith.addf %21, %22 : vector<16x4xf32>
    %24 = arith.subf %20, %23 : vector<16x4xf32>
    %25 = vector.extract_strided_slice %17 {offsets = [0, 8], sizes = [16, 4], strides = [1, 1]} : vector<16x12xf32> to vector<16x4xf32>
    %26 = tpu.concatenate %20, %24, %25 in 1 : vector<16x4xf32>, vector<16x4xf32>, vector<16x4xf32> -> vector<16x12xf32>
    %c0_11 = arith.constant 0 : index
    %c0_12 = arith.constant 0 : index
    %27 = vector.load %arg6[%c0_11, %c0_12] : memref<16x12xf32, #tpu.memory_space<vmem>>, vector<16x12xf32>
    tpu.vector_store %arg6[%c0_11, %c0_12], %26 {strides = array<i32>} : memref<16x12xf32, #tpu.memory_space<vmem>>, vector<16x12xf32>,
    %28 = tpu.iota {dimensions = array<i32: 0>} : vector<16x1xi32>
    %c16_i32 = arith.constant 16 : i32
    %29 = arith.muli %arg0, %c16_i32 : i32
    %30 = vector.broadcast %29 : i32 to vector<16x1xi32>
    %31 = arith.addi %28, %30 : vector<16x1xi32>
    %c14_i32 = arith.constant 14 : i32
    %32 = vector.broadcast %c14_i32 : i32 to vector<16x1xi32>
    %33 = arith.cmpi slt, %31, %32 : vector<16x1xi32>
    %cst_13 = arith.constant 1.000000e+00 : f32
    %34 = vector.broadcast %cst_13 : f32 to vector<1x8xf32>
    %cst_14 = arith.constant 0.000000e+00 : f32
    %35 = vector.shape_cast %33 : vector<16x1xi1> to vector<16x1xi1>
    %36 = vector.broadcast %35 : vector<16x1xi1> to vector<16x4xi1>
    %37 = vector.broadcast %cst_14 : f32 to vector<16x4xf32>
    %38 = arith.select %36, %20, %37 : vector<16x4xi1>, vector<16x4xf32>
    %39 = arith.mulf %38, %38 : vector<16x4xf32>
    %40 = vector.shape_cast %39 : vector<16x4xf32> to vector<1x16x4xf32>
    %cst_15 = arith.constant dense<0.000000e+00> : vector<1xf32>
    %41 = vector.multi_reduction <add>, %40, %cst_15 [1, 2] : vector<1x16x4xf32> to vector<1xf32>
    %42 = vector.shape_cast %41 : vector<1xf32> to vector<1x1x1xf32>
    %43 = vector.extract %42[0, 0, 0] : f32 from vector<1x1x1xf32>
    %44 = vector.broadcast %43 : f32 to vector<1x8xf32>
    %45 = arith.mulf %44, %34 : vector<1x8xf32>
    %cst_16 = arith.constant 0.000000e+00 : f32
    %46 = vector.shape_cast %33 : vector<16x1xi1> to vector<16x1xi1>
    %47 = vector.broadcast %46 : vector<16x1xi1> to vector<16x4xi1>
    %48 = vector.broadcast %cst_16 : f32 to vector<16x4xf32>
    %49 = arith.select %47, %24, %48 : vector<16x4xi1>, vector<16x4xf32>
    %50 = arith.mulf %49, %49 : vector<16x4xf32>
    %51 = vector.shape_cast %50 : vector<16x4xf32> to vector<1x16x4xf32>
    %cst_17 = arith.constant dense<0.000000e+00> : vector<1xf32>
    %52 = vector.multi_reduction <add>, %51, %cst_17 [1, 2] : vector<1x16x4xf32> to vector<1xf32>
    %53 = vector.shape_cast %52 : vector<1xf32> to vector<1x1x1xf32>
    %54 = vector.extract %53[0, 0, 0] : f32 from vector<1x1x1xf32>
    %55 = vector.broadcast %54 : f32 to vector<1x8xf32>
    %56 = arith.mulf %55, %34 : vector<1x8xf32>
    %cst_18 = arith.constant 0.000000e+00 : f32
    %57 = vector.shape_cast %33 : vector<16x1xi1> to vector<16x1xi1>
    %58 = vector.broadcast %57 : vector<16x1xi1> to vector<16x4xi1>
    %59 = vector.broadcast %cst_18 : f32 to vector<16x4xf32>
    %60 = arith.select %58, %25, %59 : vector<16x4xi1>, vector<16x4xf32>
    %61 = arith.mulf %60, %60 : vector<16x4xf32>
    %62 = vector.shape_cast %61 : vector<16x4xf32> to vector<1x16x4xf32>
    %cst_19 = arith.constant dense<0.000000e+00> : vector<1xf32>
    %63 = vector.multi_reduction <add>, %62, %cst_19 [1, 2] : vector<1x16x4xf32> to vector<1xf32>
    %64 = vector.shape_cast %63 : vector<1xf32> to vector<1x1x1xf32>
    %65 = vector.extract %64[0, 0, 0] : f32 from vector<1x1x1xf32>
    %66 = vector.broadcast %65 : f32 to vector<1x8xf32>
    %67 = arith.mulf %66, %34 : vector<1x8xf32>
    %cst_20 = arith.constant 0.000000e+00 : f32
    %68 = vector.broadcast %cst_20 : f32 to vector<5x8xf32>
    %69 = tpu.concatenate %45, %56, %67, %68 in 0 : vector<1x8xf32>, vector<1x8xf32>, vector<1x8xf32>, vector<5x8xf32> -> vector<8x8xf32>
    %c0_21 = arith.constant 0 : index
    %c0_22 = arith.constant 0 : index
    %70 = vector.load %arg7[%c0_21, %c0_22] : memref<8x8xf32, #tpu.memory_space<vmem>>, vector<8x8xf32>
    tpu.vector_store %arg7[%c0_21, %c0_22], %69 {strides = array<i32>} : memref<8x8xf32, #tpu.memory_space<vmem>>, vector<8x8xf32>,
    return
  }
  func.func @transform_0(%arg0: i32) -> (i32, i32) {
    %c0_i32 = arith.constant 0 : i32
    %c0_i32_0 = arith.constant 0 : i32
    return %arg0, %c0_i32 : i32, i32
  }
  func.func @transform_1(%arg0: i32) -> (i32, i32) {
    %c0_i32 = arith.constant 0 : i32
    %c0_i32_0 = arith.constant 0 : i32
    %c0_i32_1 = arith.constant 0 : i32
    return %c0_i32, %c0_i32_0 : i32, i32
  }
  func.func @transform_2(%arg0: i32) -> (i32, i32) {
    %c0_i32 = arith.constant 0 : i32
    %c0_i32_0 = arith.constant 0 : i32
    %c0_i32_1 = arith.constant 0 : i32
    return %c0_i32, %c0_i32_0 : i32, i32
  }
  func.func @transform_3(%arg0: i32) -> (i32, i32) {
    %c0_i32 = arith.constant 0 : i32
    %c0_i32_0 = arith.constant 0 : i32
    %c0_i32_1 = arith.constant 0 : i32
    return %c0_i32, %c0_i32_0 : i32, i32
  }
  func.func @transform_4(%arg0: i32) -> (i32, i32) {
    %c0_i32 = arith.constant 0 : i32
    %c0_i32_0 = arith.constant 0 : i32
    %c0_i32_1 = arith.constant 0 : i32
    return %c0_i32, %c0_i32_0 : i32, i32
  }
  func.func @transform_5(%arg0: i32) -> (i32, i32) {
    %c0_i32 = arith.constant 0 : i32
    %c0_i32_0 = arith.constant 0 : i32
    return %arg0, %c0_i32 : i32, i32
  }
  func.func @transform_6(%arg0: i32) -> (i32, i32) {
    %c0_i32 = arith.constant 0 : i32
    %c0_i32_0 = arith.constant 0 : i32
    return %arg0, %c0_i32 : i32, i32
  }
}

</mosaic_0001>

<llo_original>
// kernel: tpu_custom_call.1
$region0: #{tpu_custom_call.1}
  #allocation0 [shape = 'u32[]', space=smem, size = 0x4, offset = 0x4, fixed_abs, tag = 'smem constant byte address 0x4 - core index']
  #allocation1 [shape = 'u32[144,128]{1,0:T(1,128)}', space=vmem, size = 0x12000, scoped, tag = 'internal scratch']
  %s0 = inlined_call_operand.vmem [shape: f32[14,32], index: 0, kind: input, shape index: {}]
  %s1 = inlined_call_operand.vmem [shape: f32[32,24], index: 1, kind: input, shape index: {}]
  %s2 = inlined_call_operand.vmem [shape: f32[1,16], index: 2, kind: input, shape index: {}]
  %s3 = inlined_call_operand.vmem [shape: f32[16,12], index: 3, kind: input, shape index: {}]
  %s4 = inlined_call_operand.vmem [shape: f32[1,12], index: 4, kind: input, shape index: {}]
  %s5 = inlined_call_operand.hbm [shape: f32[14,12], index: 5, kind: output, shape index: {0}]
  %s6 = inlined_call_operand.hbm [shape: f32[8,8], index: 6, kind: output, shape index: {1}]
  %7 = xla_tuple %s5, %s6
  %s8 = sld [smem:[#allocation0]]
  $region38: #{tpu_custom_call.1} parent=0
    _
  %s10 = ssub.s32 1, %s8
  %s11 = scalar_select 0, %s10, %s8
  $region1: #{tpu_custom_call.1} parent=0
    #allocation2 [shape = 'u8[8192]{0}', space=vmem, size = 0x2000, scoped, tag = 'output window, operand 0, single buffered']
    #allocation3 [shape = 's32[1]{0}', space=sflag, size = 0x4, scoped, tag = 'scoped memory for tpu_custom_call.1']
    #allocation4 [shape = 'u8[4096]{0}', space=vmem, size = 0x1000, scoped, tag = 'output window, operand 1, single buffered']
    #allocation5 [shape = 's32[1]{0}', space=sflag, size = 0x4, scoped, tag = 'scoped memory for tpu_custom_call.1']
    %12 = vsyncpa [#allocation3], 0
    %13 = vsyncpa [#allocation5], 0
    // Predicated region
    $region2: #{tpu_custom_call.1} parent=1 // pred_check
      _
    $region3: #{tpu_custom_call.1} parent=1 // pred_check_branch
      %15 = sbr.rel (0) target = $region5
    $region4: #{tpu_custom_call.1} parent=1 // pred_region
      _
    $region5: #{tpu_custom_call.1} parent=1 // pred_fallthru
      _
    // Predicated region
    $region6: #{tpu_custom_call.1} parent=1 // pred_check
      _
    $region7: #{tpu_custom_call.1} parent=1 // pred_check_branch
      %17 = sbr.rel (0) target = $region9
    $region8: #{tpu_custom_call.1} parent=1 // pred_region
      _
    $region9: #{tpu_custom_call.1} parent=1 // pred_fallthru
      _
    // Predicated region
    $region10: #{tpu_custom_call.1} parent=1 // pred_check
      _
    $region11: #{tpu_custom_call.1} parent=1 // pred_check_branch
      %19 = sbr.rel (0) target = $region13
    $region12: #{tpu_custom_call.1} parent=1 // pred_region
      _
    $region13: #{tpu_custom_call.1} parent=1 // pred_fallthru
      _
    // Predicated region
    $region14: #{tpu_custom_call.1} parent=1 // pred_check
      _
    $region15: #{tpu_custom_call.1} parent=1 // pred_check_branch
      %21 = sbr.rel (0) target = $region17
    $region16: #{tpu_custom_call.1} parent=1 // pred_region
      _
    $region17: #{tpu_custom_call.1} parent=1 // pred_fallthru
      _
    // Predicated region
    $region18: #{tpu_custom_call.1} parent=1 // pred_check
      _
    $region19: #{tpu_custom_call.1} parent=1 // pred_check_branch
      %23 = sbr.rel (0) target = $region21
    $region20: #{tpu_custom_call.1} parent=1 // pred_region
      _
    $region21: #{tpu_custom_call.1} parent=1 // pred_fallthru
      _
    %v24 = vld [vmem:[%s0] sm:$0xff]
    %v25 = vld [vmem:[%s0 + $0x8] sm:$0xff]
    %v26 = vld [vmem:[%s1] sm:$0xff]
    %v27 = vld [vmem:[%s1 + $0x8] sm:$0xff]
    %v28 = vld [vmem:[%s1 + $0x10] sm:$0xff]
    %v29 = vld [vmem:[%s1 + $0x18] sm:$0xff]
    %vm30 = vcmask 261120
    %v32 = vsel %vm30, %v24, 0
    %v35 = vsel %vm30, %v25, 0
    %37 = vmatprep.subr.mxu0 0.0
    %38 = vmatpush1.msra.mxu0 %v26
    %39 = vmatprep.subr.mxu0 0.0
    %40 = vmatpush1.msra.mxu0 %v27
    %41 = vmatprep.subr.mxu0 0.0
    %42 = vmatpush1.msra.mxu0 %v28
    %43 = vmatprep.subr.mxu0 0.0
    %44 = vmatpush1.msra.mxu0 %v29
    %45 = vmatprep.subr.mxu0 0.0
    %46 = vmatpush1.msra.mxu0 0.0
    %47 = vmatprep.subr.mxu0 0.0
    %48 = vmatpush1.msra.mxu0 0.0
    %49 = vmatprep.subr.mxu0 0.0
    %50 = vmatpush1.msra.mxu0 0.0
    %51 = vmatprep.subr.mxu0 0.0
    %52 = vmatpush1.msra.mxu0 0.0
    %53 = vmatprep.subr.mxu0 0.0
    %54 = vmatpush1.msra.mxu0 0.0
    %55 = vmatprep.subr.mxu0 0.0
    %56 = vmatpush1.msra.mxu0 0.0
    %57 = vmatprep.subr.mxu0 0.0
    %58 = vmatpush1.msra.mxu0 0.0
    %59 = vmatprep.subr.mxu0 0.0
    %60 = vmatpush1.msra.mxu0 0.0
    %61 = vmatprep.subr.mxu0 0.0
    %62 = vmatpush1.msra.mxu0 0.0
    %63 = vmatprep.subr.mxu0 0.0
    %64 = vmatpush1.msra.mxu0 0.0
    %65 = vmatprep.subr.mxu0 0.0
    %66 = vmatpush1.msra.mxu0 0.0
    %67 = vmatprep.subr.mxu0 0.0
    %68 = vmatpush1.msra.mxu0 0.0
    %69 = vmatprep.subr.mxu0 0.0
    %70 = vmatpush1.msra.mxu0 0.0
    %71 = vmatprep.subr.mxu0 0.0
    %72 = vmatpush1.msra.mxu0 0.0
    %73 = vmatprep.subr.mxu0 0.0
    %74 = vmatpush1.msra.mxu0 0.0
    %75 = vmatprep.subr.mxu0 0.0
    %76 = vmatpush1.msra.mxu0 0.0
    %77 = vmatprep.subr.mxu0 0.0
    %78 = vmatpush1.msra.mxu0 0.0
    %79 = vmatprep.subr.mxu0 0.0
    %80 = vmatpush1.msra.mxu0 0.0
    %81 = vmatprep.subr.mxu0 0.0
    %82 = vmatpush1.msra.mxu0 0.0
    %83 = vmatprep.subr.mxu0 0.0
    %84 = vmatpush1.msra.mxu0 0.0
    %85 = vmatprep.subr.mxu0 0.0
    %86 = vmatpush1.msra.mxu0 0.0
    %87 = vmatprep.subr.mxu0 0.0
    %88 = vmatpush1.msra.mxu0 0.0
    %89 = vmatprep.subr.mxu0 0.0
    %90 = vmatpush1.msra.mxu0 0.0
    %91 = vmatprep.subr.mxu0 0.0
    %92 = vmatpush1.msra.mxu0 0.0
    %93 = vmatprep.subr.mxu0 0.0
    %94 = vmatpush1.msra.mxu0 0.0
    %95 = vmatprep.subr.mxu0 0.0
    %96 = vmatpush1.msra.mxu0 0.0
    %97 = vmatprep.subr.mxu0 0.0
    %98 = vmatpush1.msra.mxu0 0.0
    %99 = vmatprep.subr.mxu0 0.0
    %100 = vmatpush1.msra.mxu0 0.0
    %101 = vmatprep.mubr.f32.mxu0 0.0
    %102 = vmatmul.mubr.f32.gmra.mrb[0].mxu0 %v32
    %v103 = vpop.f32.mrb[0].mxu0
    %v104 = vadd.f32 0.0, %v103
    %v105 = vpop.f32.mrb[0].mxu0
    %106 = vmatprep.mubr.f32.mxu0 0.0
    %107 = vmatmul.mubr.f32.gmra.mrb[0].mxu0 %v35
    %v108 = vpop.f32.mrb[0].mxu0
    %v109 = vadd.f32 0.0, %v108
    %v110 = vpop.f32.mrb[0].mxu0
    %111 = vdwg.mxu0
    %v112 = vld [vmem:[%s2] sm:$0x1]
    %v114 = vlaneseq
    %v115 = vshrl.u32 %v114, 7
    %v116 = vsub.s32 0, %v115
    %v117 = vrot.slane %v112, %v116
    %118 = vrot.lane.b32.xlu0 %v117, 8
    %v119 = vpop.permute.xlu0 %118
    %v121 = vadd.f32 %v104, %v119
    %v122 = vadd.f32 %v109, %v119
    %v123 = vxor.u32 %v121, 2147483648
    %v124 = vxor.u32 %v122, 2147483648
    %v125 = vmul.f32 %v123, 1.442695
    %v126 = vpow.pop %v125
    %v127 = vmul.f32 %v124, 1.442695
    %v128 = vpow.pop %v127
    %v129 = vadd.f32 %v126, 1.0
    %v130 = vadd.f32 %v128, 1.0
    %v131 = vrcp.pop %v129
    %v132 = vmul.f32 1.0, %v131
    %v133 = vrcp.pop %v130
    %v134 = vmul.f32 1.0, %v133
    %v135 = vmul.f32 %v121, %v132
    %v136 = vmul.f32 %v122, %v134
    %v137 = vld [vmem:[%s3] sm:$0xff]
    %v138 = vld [vmem:[%s3 + $0x8] sm:$0xff]
    %v139 = vld [vmem:[%s4] sm:$0x1]
    %v141 = vlaneseq
    %v142 = vshrl.u32 %v141, 7
    %v143 = vsub.s32 0, %v142
    %v144 = vrot.slane %v139, %v143
    %148 = vrot.lane.b32.xlu0 %v135, 120
    %v149 = vpop.permute.xlu0 %148
    %150 = vrot.lane.b32.xlu0 %v136, 120
    %v151 = vpop.permute.xlu0 %150
    %vm152 = vcmask 130048
    %v153 = vsel %vm152, %v149, 0
    %v155 = vsel %vm152, %v151, 0
    %157 = vmatprep.subr.mxu0 0.0
    %158 = vmatpush1.msra.mxu0 %v137
    %159 = vmatprep.subr.mxu0 0.0
    %160 = vmatpush1.msra.mxu0 %v138
    %161 = vmatprep.subr.mxu0 0.0
    %162 = vmatpush1.msra.mxu0 0.0
    %163 = vmatprep.subr.mxu0 0.0
    %164 = vmatpush1.msra.mxu0 0.0
    %165 = vmatprep.subr.mxu0 0.0
    %166 = vmatpush1.msra.mxu0 0.0
    %167 = vmatprep.subr.mxu0 0.0
    %168 = vmatpush1.msra.mxu0 0.0
    %169 = vmatprep.subr.mxu0 0.0
    %170 = vmatpush1.msra.mxu0 0.0
    %171 = vmatprep.subr.mxu0 0.0
    %172 = vmatpush1.msra.mxu0 0.0
    %173 = vmatprep.subr.mxu0 0.0
    %174 = vmatpush1.msra.mxu0 0.0
    %175 = vmatprep.subr.mxu0 0.0
    %176 = vmatpush1.msra.mxu0 0.0
    %177 = vmatprep.subr.mxu0 0.0
    %178 = vmatpush1.msra.mxu0 0.0
    %179 = vmatprep.subr.mxu0 0.0
    %180 = vmatpush1.msra.mxu0 0.0
    %181 = vmatprep.subr.mxu0 0.0
    %182 = vmatpush1.msra.mxu0 0.0
    %183 = vmatprep.subr.mxu0 0.0
    %184 = vmatpush1.msra.mxu0 0.0
    %185 = vmatprep.subr.mxu0 0.0
    %186 = vmatpush1.msra.mxu0 0.0
    %187 = vmatprep.subr.mxu0 0.0
    %188 = vmatpush1.msra.mxu0 0.0
    %189 = vmatprep.subr.mxu0 0.0
    %190 = vmatpush1.msra.mxu0 0.0
    %191 = vmatprep.subr.mxu0 0.0
    %192 = vmatpush1.msra.mxu0 0.0
    %193 = vmatprep.subr.mxu0 0.0
    %194 = vmatpush1.msra.mxu0 0.0
    %195 = vmatprep.subr.mxu0 0.0
    %196 = vmatpush1.msra.mxu0 0.0
    %197 = vmatprep.subr.mxu0 0.0
    %198 = vmatpush1.msra.mxu0 0.0
    %199 = vmatprep.subr.mxu0 0.0
    %200 = vmatpush1.msra.mxu0 0.0
    %201 = vmatprep.subr.mxu0 0.0
    %202 = vmatpush1.msra.mxu0 0.0
    %203 = vmatprep.subr.mxu0 0.0
    %204 = vmatpush1.msra.mxu0 0.0
    %205 = vmatprep.subr.mxu0 0.0
    %206 = vmatpush1.msra.mxu0 0.0
    %207 = vmatprep.subr.mxu0 0.0
    %208 = vmatpush1.msra.mxu0 0.0
    %209 = vmatprep.subr.mxu0 0.0
    %210 = vmatpush1.msra.mxu0 0.0
    %211 = vmatprep.subr.mxu0 0.0
    %212 = vmatpush1.msra.mxu0 0.0
    %213 = vmatprep.subr.mxu0 0.0
    %214 = vmatpush1.msra.mxu0 0.0
    %215 = vmatprep.subr.mxu0 0.0
    %216 = vmatpush1.msra.mxu0 0.0
    %217 = vmatprep.subr.mxu0 0.0
    %218 = vmatpush1.msra.mxu0 0.0
    %219 = vmatprep.subr.mxu0 0.0
    %220 = vmatpush1.msra.mxu0 0.0
    %221 = vmatprep.mubr.f32.mxu0 0.0
    %222 = vmatmul.mubr.f32.gmra.mrb[0].mxu0 %v153
    %v223 = vpop.f32.mrb[0].mxu0
    %v224 = vadd.f32 %v144, %v223
    %v225 = vpop.f32.mrb[0].mxu0
    %226 = vmatprep.mubr.f32.mxu0 0.0
    %227 = vmatmul.mubr.f32.gmra.mrb[0].mxu0 %v155
    %v228 = vpop.f32.mrb[0].mxu0
    %v229 = vadd.f32 %v144, %v228
    %v230 = vpop.f32.mrb[0].mxu0
    %231 = vdwg.mxu0
    %v232 = vadd.f32 %v104, %v224
    %v233 = vadd.f32 %v109, %v229
    %236 = vrot.lane.b32.xlu0 %v232, 124
    %v237 = vpop.permute.xlu0 %236
    %238 = vrot.lane.b32.xlu0 %v233, 124
    %v239 = vpop.permute.xlu0 %238
    %v242 = vsub.f32 %v232, %v237
    %v243 = vsub.f32 %v233, %v239
    %246 = vrot.lane.b32.xlu0 %v242, 4
    %v247 = vpop.permute.xlu0 %246
    %248 = vrot.lane.b32.xlu0 %v243, 4
    %v249 = vpop.permute.xlu0 %248
    %vm252 = vcmask 31744
    %v253 = vsel %vm252, %v232, %v247
    %v254 = vsel %vm252, %v233, %v249
    %vm255 = vcmask 64512
    %v256 = vsel %vm255, %v253, %v224
    %v257 = vsel %vm255, %v254, %v229
    %vm258 = vcmask 97280
    %259 = vst.msk [vmem:[#allocation2] sm:$0xff] %vm258, %v256
    %260 = vst.msk [vmem:[#allocation2 + $0x8] sm:$0xff] %vm258, %v257
    %v261 = vlaneseq
    %v262 = vshrl.u32 %v261, 7
    %v263 = vadd.s32 %v262, 8
    %s264 = smul.u32 0, 16
    %v265 = vstv %s264
    %v266 = vadd.s32 %v262, %v265
    %v267 = vadd.s32 %v263, %v265
    %vm268 = vcmp.lt.s32.totalorder %v266, 14
    %vm269 = vcmp.lt.s32.totalorder %v267, 14
    %v270 = vsel %vm268, 1, 0
    %v271 = vsel %vm269, 1, 0
    %vm272 = vcmp.eq.s32.totalorder %v270, 1
    %vm273 = vcmp.eq.s32.totalorder %v271, 1
    %v274 = vsel %vm272, %v232, 0.0
    %v275 = vsel %vm273, %v233, 0.0
    %v276 = vmul.f32 %v274, %v274
    %v277 = vmul.f32 %v275, %v275
    %v278 = vsel %vm252, %v276, 0.0
    %v279 = vsel %vm252, %v277, 0.0
    %v280 = vadd.f32 %v278, %v279
    %281 = vadd.xlane.f32.xlu0 %v280
    %v282 = vpop.xlane.xlu0 %281
    %v283 = vrot.slane %v282, 4
    %v284 = vadd.f32 %v282, %v283
    %v285 = vrot.slane %v284, 2
    %v286 = vadd.f32 %v284, %v285
    %v287 = vrot.slane %v286, 1
    %v288 = vadd.f32 %v286, %v287
    %s289 = vtos %v288
    %v290 = vstv %s289
    %v291 = vsel %vm272, %v242, 0.0
    %v292 = vsel %vm273, %v243, 0.0
    %v293 = vmul.f32 %v291, %v291
    %v294 = vmul.f32 %v292, %v292
    %v295 = vsel %vm252, %v293, 0.0
    %v296 = vsel %vm252, %v294, 0.0
    %v297 = vadd.f32 %v295, %v296
    %298 = vadd.xlane.f32.xlu0 %v297
    %v299 = vpop.xlane.xlu0 %298
    %v300 = vrot.slane %v299, 4
    %v301 = vadd.f32 %v299, %v300
    %v302 = vrot.slane %v301, 2
    %v303 = vadd.f32 %v301, %v302
    %v304 = vrot.slane %v303, 1
    %v305 = vadd.f32 %v303, %v304
    %s306 = vtos %v305
    %v307 = vstv %s306
    %v308 = vsel %vm272, %v224, 0.0
    %v309 = vsel %vm273, %v229, 0.0
    %v310 = vmul.f32 %v308, %v308
    %v311 = vmul.f32 %v309, %v309
    %314 = vrot.lane.b32.xlu0 %v310, 120
    %v315 = vpop.permute.xlu0 %314
    %316 = vrot.lane.b32.xlu0 %v311, 120
    %v317 = vpop.permute.xlu0 %316
    %v320 = vsel %vm252, %v315, 0.0
    %v321 = vsel %vm252, %v317, 0.0
    %v322 = vadd.f32 %v320, %v321
    %323 = vadd.xlane.f32.xlu0 %v322
    %v324 = vpop.xlane.xlu0 %323
    %v325 = vrot.slane %v324, 4
    %v326 = vadd.f32 %v324, %v325
    %v327 = vrot.slane %v326, 2
    %v328 = vadd.f32 %v326, %v327
    %v329 = vrot.slane %v328, 1
    %v330 = vadd.f32 %v328, %v329
    %s331 = vtos %v330
    %v332 = vstv %s331
    %vm333 = vcmask 1040384
    %v334 = vsel %vm333, %v290, %v307
    %vm335 = vcmask 1041408
    %v336 = vsel %vm335, %v334, %v332
    %vm337 = vcmask 1042432
    %v338 = vsel %vm337, %v336, 0.0
    %339 = vst.msk [vmem:[#allocation4] sm:$0xff] %vm255, %v338
    // Predicated region
    $region22: #{tpu_custom_call.1} parent=1 // pred_check
      _
    $region23: #{tpu_custom_call.1} parent=1 // pred_check_branch
      %341 = sbr.rel (0) target = $region25
    $region24: #{tpu_custom_call.1} parent=1 // pred_region
      %s343 = ssub.s32 256, 256
      %344 = vsyncadd [#allocation3], %s343
      %s345 = sshll.u32 [#allocation2], 4
      %s346 = int_to_ptr.vmem [resolvable:$true] %s345
      %351 = dma.vmem_to_hbm [thread:$0]  %s346, 256, %s5, [#allocation3], 128, 128, 8
    $region25: #{tpu_custom_call.1} parent=1 // pred_fallthru
      _
    // Predicated region
    $region26: #{tpu_custom_call.1} parent=1 // pred_check
      _
    $region27: #{tpu_custom_call.1} parent=1 // pred_check_branch
      %353 = sbr.rel (0) target = $region29
    $region28: #{tpu_custom_call.1} parent=1 // pred_region
      %s355 = ssub.s32 128, 128
      %356 = vsyncadd [#allocation5], %s355
      %s358 = sshll.u32 [#allocation4], 4
      %s359 = int_to_ptr.vmem [resolvable:$true] %s358
      %361 = dma.vmem_to_hbm [thread:$0]  %s359, 128, %s6, [#allocation5]
    $region29: #{tpu_custom_call.1} parent=1 // pred_fallthru
      _
    // Predicated region
    $region30: #{tpu_custom_call.1} parent=1 // pred_check
      _
    $region31: #{tpu_custom_call.1} parent=1 // pred_check_branch
      %363 = sbr.rel (0) target = $region33
    $region32: #{tpu_custom_call.1} parent=1 // pred_region
      %364 = dma.done [#allocation3], 256
    $region33: #{tpu_custom_call.1} parent=1 // pred_fallthru
      _
    // Predicated region
    $region34: #{tpu_custom_call.1} parent=1 // pred_check
      _
    $region35: #{tpu_custom_call.1} parent=1 // pred_check_branch
      %366 = sbr.rel (0) target = $region37
    $region36: #{tpu_custom_call.1} parent=1 // pred_region
      %367 = dma.done [#allocation5], 128
    $region37: #{tpu_custom_call.1} parent=1 // pred_fallthru
      _
    %368 = vsyncpa [#allocation3], 1
    %369 = vsyncpa [#allocation5], 1

</llo_original>
